<compile_context>
chip_gen: v7x
topology: tpu7x:2x2x1
jax: 0.10.0
libtpu: 0.0.40
codegen_flags: <defaults>
</compile_context>

<pallas_src>
import jax
import jax.numpy as jnp
from jax.experimental import pallas as pl
from jax.experimental.pallas import tpu as pltpu

LANE = 128   # vreg lane width
_F32 = 4     # bytes


# ----------------------------------------------------------------------------
# Kernel
# ----------------------------------------------------------------------------
def mean_pool_classifier_kernel(lhs_ref, mask_ref, w_ref, b_ref, out_ref,
                                acc_ref, den_ref):
    """Fused masked mean pooling (S-chunked reduction) + classifier.

    lhs_ref:  (TB, TS, H)   last_hidden_state chunk (f32 or bf16)
    mask_ref: (TB, TS)      attention mask chunk (f32)
    w_ref:    (H, C_PAD)    classifier weight, transposed + zero-padded to 128 lanes
    b_ref:    (1, C_PAD)    classifier bias, zero-padded
    out_ref:  (TB, C_PAD)   lane-dense logits tile (resident across the k axis)
    acc_ref:  (TB, H)       f32 masked-sum accumulator (scratch)
    den_ref:  (TB, 1)       f32 token-count accumulator (scratch)
    """
    k = pl.program_id(1)

    @pl.when(k == 0)
    def _init():
        acc_ref[...] = jnp.zeros_like(acc_ref)
        den_ref[...] = jnp.zeros_like(den_ref)

    # Upcast per block: a bf16 backbone output can be streamed in directly
    # (2 bytes/elem over HBM); no wrapper-side cast (that would be an extra
    # full HBM pass).
    lhs = lhs_ref[...].astype(jnp.float32)          # (TB, TS, H)
    mask = mask_ref[...]                            # (TB, TS), f32

    # Masked sum over this sequence chunk.  The (TB, TS, H) product temporary
    # is bounded by the S-chunk size and is explicitly budgeted by the tile
    # picker below.
    acc_ref[...] += jnp.sum(lhs * mask[:, :, None], axis=1)      # (TB, H)
    den_ref[...] += jnp.sum(mask, axis=1, keepdims=True)         # (TB, 1)

    @pl.when(k == pl.num_programs(1) - 1)
    def _finalize():
        denom = jnp.maximum(den_ref[...], 1e-9)                  # (TB, 1)
        # Single classifier application == average of N dropout-free branches.
        logits = jnp.dot(acc_ref[...], w_ref[...],
                         preferred_element_type=jnp.float32)     # (TB, C_PAD)
        # Scale after the matmul: (TB,128) work instead of a (TB,H) divide.
        out_ref[...] = logits / denom + b_ref[...]


# ----------------------------------------------------------------------------
# Tiling / VMEM budgeting
# ----------------------------------------------------------------------------
def _round_up(x, m):
    return ((x + m - 1) // m) * m


def _vmem_budget_bytes():
    """Generation-aware scoped-VMEM budget (~70% of physical).

    v7x (64 MiB physical)  -> ~45 MiB
    v5e/v6e (128 MiB)      -> ~90 MiB
    """
    cap = None
    try:
        info = pltpu.get_tpu_info()
        cap = getattr(info, "vmem_capacity_bytes", None)
    except Exception:
        cap = None
    if not cap:
        cap = 64 * 1024 * 1024        # conservative (v7x-sized) fallback
    return int(cap * 0.70)


def _step_bytes(tb, ts, h, lhs_itemsize):
    """Worst-case live VMEM for one pipeline step (all buffers accounted)."""
    lhs = 2 * tb * ts * h * lhs_itemsize          # double-buffered hidden-state block
    tmp = tb * ts * h * _F32                      # masked-product temporary (f32)
    msk = 2 * tb * ts * _F32                      # double-buffered mask block
    out = 2 * tb * LANE * _F32                    # double-buffered output block
    wb = 2 * (h * LANE + LANE) * _F32             # resident weight + bias (count x2)
    acc = tb * (h + LANE) * _F32                  # accumulator + padded denominator
    return lhs + tmp + msk + out + wb + acc


def _pick_tiles(B, S, H, lhs_itemsize, budget):
    """Pick (TB, TS) so every live buffer fits the budget and layout rules hold.

    Layout rules honored:
      * mask block (TB, TS): TB multiple of 8 or == B; TS multiple of 128 or == S.
      * lhs block (TB, TS, H): TS multiple of 8 (any multiple of 128, or == S); H full.
      * S is never split into partial chunks (TS divides S), so the reduction
        never sees out-of-bounds garbage.
    """
    # Sequence-chunk candidates: full S first, then multiples of 128 dividing S.
    ts_cands = [S]
    if S % 128 == 0:
        t = 512
        while t >= 128:
            if t < S and S % t == 0:
                ts_cands.append(t)
            t -= 128

    for ts in ts_cands:
        per_tb = (2 * ts * H * lhs_itemsize      # lhs double buffer
                  + ts * H * _F32                # masked-product temp
                  + 2 * ts * _F32                # mask double buffer
                  + 2 * LANE * _F32              # out double buffer
                  + (H + LANE) * _F32)           # scratch
        fixed = 2 * (H * LANE + LANE) * _F32     # resident weight + bias
        tb_max = (budget - fixed) // per_tb
        if tb_max >= B:
            tb = B
        else:
            tb = (tb_max // 8) * 8               # sublane rule for mask/out blocks
        if tb >= min(B, 8):
            # v7x megacore: keep >= 2 batch grid steps when B allows it so the
            # 'parallel' axis actually splits across the two TensorCores.
            if B >= 16:
                tb = min(tb, _round_up(pl.cdiv(B, 2), 8))
            return tb, ts

    # Fallback for extreme S*H with S not a multiple of 128: smallest legal tiles.
    return min(B, 8), ts_cands[-1]


# ----------------------------------------------------------------------------
# Wrapper
# ----------------------------------------------------------------------------
def prepare_classifier_params(w_cls, b_cls):
    """Pad classifier params to a lane-dense 128-wide output ONCE (hoisted out
    of the per-call path so the padded weight is a truly resident constant)."""
    C, H = w_cls.shape
    c_pad = _round_up(C, LANE)
    w_pad = jnp.zeros((H, c_pad), jnp.float32).at[:, :C].set(
        w_cls.T.astype(jnp.float32))
    b_pad = jnp.zeros((1, c_pad), jnp.float32).at[:, :C].set(
        b_cls.astype(jnp.float32))
    return w_pad, b_pad


def multidrop_forward(last_hidden_state, attention_mask, w_pad, b_pad, num_labels):
    """last_hidden_state: (B, S, H) f32/bf16; attention_mask: (B, S);
    w_pad: (H, C_pad); b_pad: (1, C_pad). Returns (B, num_labels) f32 logits."""
    B, S, H = last_hidden_state.shape
    c_pad = w_pad.shape[1]
    lhs_itemsize = jnp.dtype(last_hidden_state.dtype).itemsize

    mask_f = attention_mask.astype(jnp.float32)     # tiny (B, S) cast

    budget = _vmem_budget_bytes()
    TB, TS = _pick_tiles(B, S, H, lhs_itemsize, budget)
    grid = (pl.cdiv(B, TB), pl.cdiv(S, TS))         # reduction axis (S chunks) last

    # Advisory cost: the kernel is HBM-bandwidth bound (~2 flops/elem).
    cost = pl.CostEstimate(
        flops=2 * B * S * H + 2 * B * H * c_pad,
        transcendentals=0,
        bytes_accessed=(B * S * H * lhs_itemsize + B * S * _F32
                        + B * c_pad * _F32 + (H * c_pad + c_pad) * _F32),
    )

    out_pad = pl.pallas_call(
        mean_pool_classifier_kernel,
        out_shape=jax.ShapeDtypeStruct((B, c_pad), jnp.float32),
        grid_spec=pltpu.PrefetchScalarGridSpec(
            num_scalar_prefetch=0,
            grid=grid,
            in_specs=[
                # Hidden-state chunk, tiled over batch and sequence.
                # (If DMA is exposed at small tiles, pipeline_mode=pl.Buffered(3)
                #  on this spec is the next lever — costs VMEM, so apply after
                #  tile sizing.)
                pl.BlockSpec((TB, TS, H), lambda i, k: (i, k, 0)),
                pl.BlockSpec((TB, TS), lambda i, k: (i, k)),
                pl.BlockSpec((H, c_pad), lambda i, k: (0, 0)),    # resident weight
                pl.BlockSpec((1, c_pad), lambda i, k: (0, 0)),    # resident bias
            ],
            out_specs=pl.BlockSpec((TB, c_pad), lambda i, k: (i, 0)),
            scratch_shapes=[
                pltpu.VMEM((TB, H), jnp.float32),   # masked-sum accumulator
                pltpu.VMEM((TB, 1), jnp.float32),   # token-count accumulator
            ],
        ),
        compiler_params=pltpu.CompilerParams(
            dimension_semantics=("parallel", "arbitrary"),
            vmem_limit_bytes=int(budget),
        ),
        cost_estimate=cost,
    )(last_hidden_state, mask_f, w_pad, b_pad)

    return out_pad[:, :num_labels]


# ----------------------------------------------------------------------------
# Pure-JAX reference (mirrors the PyTorch math)
# ----------------------------------------------------------------------------
def reference_forward(last_hidden_state, attention_mask, w_cls, b_cls, num_drop=5):
    mask = attention_mask.astype(jnp.float32)[:, :, None]
    summed = jnp.sum(last_hidden_state.astype(jnp.float32) * mask, axis=1)
    denom = jnp.maximum(jnp.sum(mask, axis=1), 1e-9)
    pooled = summed / denom
    logits = pooled @ w_cls.T + b_cls
    # Multi-dropout loop in eval mode: N identical branches each divided by N.
    out = logits / float(num_drop)
    for _ in range(num_drop - 1):
        out = out + logits / float(num_drop)
    return out


if __name__ == "__main__":
    # Small shapes consistent with the module (batch, seq_len, hidden_size, num_labels)
    B, S, H, C = 2, 8, 32, 3

    key = jax.random.PRNGKey(0)
    k_h, k_w, k_b = jax.random.split(key, 3)

    # TODO(synk): synthesized BERT last_hidden_state (no Pallas BERT backbone).
    last_hidden_state = jax.random.normal(k_h, (B, S, H), dtype=jnp.float32)

    # Attention mask with ragged valid lengths.
    lengths = jnp.array([8, 5], dtype=jnp.int32)
    attention_mask = (jnp.arange(S)[None, :] < lengths[:, None]).astype(jnp.int32)

    # nn.Linear(hidden_size, num_labels): weight (C, H), bias (C,)
    w_cls = 0.1 * jax.random.normal(k_w, (C, H), dtype=jnp.float32)
    b_cls = 0.1 * jax.random.normal(k_b, (C,), dtype=jnp.float32)

    # Pad classifier params once (hoisted out of the per-call path).
    w_pad, b_pad = prepare_classifier_params(w_cls, b_cls)

    logits = multidrop_forward(last_hidden_state, attention_mask, w_pad, b_pad, C)
    logits = jax.block_until_ready(logits)

    ref = reference_forward(last_hidden_state, attention_mask, w_cls, b_cls)
    assert logits.shape == (B, C)
    assert jnp.allclose(logits, ref, atol=1e-4, rtol=1e-4), "mismatch vs reference"

    print("KERNEL_OK")
</pallas_src>

<mosaic_0001>
module attributes {stable_mosaic.version = 11 : i64} {
  func.func @mean_pool_classifier_kernel(%arg0: i32, %arg1: i32, %arg2: memref<2x8x32xf32, #tpu.memory_space<vmem>>, %arg3: memref<2x8xf32, #tpu.memory_space<vmem>>, %arg4: memref<32x128xf32, #tpu.memory_space<vmem>>, %arg5: memref<1x128xf32, #tpu.memory_space<vmem>>, %arg6: memref<2x128xf32, #tpu.memory_space<vmem>>, %arg7: memref<2x32xf32, #tpu.memory_space<vmem>>, %arg8: memref<2x1xf32, #tpu.memory_space<vmem>>) attributes {dimension_semantics = [#tpu.dimension_semantics<parallel>, #tpu.dimension_semantics<arbitrary>], iteration_bounds = array<i64: 1, 1>, scalar_prefetch = 0 : i64, scratch_operands = 2 : i64, tpu.core_type = #tpu.core_type<tc>, window_params = [{transform_indices = @transform_0, window_bounds = array<i64: 2, 8, 32>}, {transform_indices = @transform_1, window_bounds = array<i64: 2, 8>}, {pipeline_mode = #tpu.pipeline_mode<synchronous>, transform_indices = @transform_2, window_bounds = array<i64: 32, 128>}, {pipeline_mode = #tpu.pipeline_mode<synchronous>, transform_indices = @transform_3, window_bounds = array<i64: 1, 128>}, {transform_indices = @transform_4, window_bounds = array<i64: 2, 128>}]} {
    %c0_i32 = arith.constant 0 : i32
    %0 = arith.cmpi eq, %arg1, %c0_i32 : i32
    %1 = arith.extui %0 : i1 to i32
    %c0_i32_0 = arith.constant 0 : i32
    %2 = arith.cmpi ne, %1, %c0_i32_0 : i32
    scf.if %2 {
      %cst_16 = arith.constant 0.000000e+00 : f32
      %20 = vector.broadcast %cst_16 : f32 to vector<2x32xf32>
      %c0_17 = arith.constant 0 : index
      %c0_18 = arith.constant 0 : index
      %21 = vector.load %arg7[%c0_17, %c0_18] : memref<2x32xf32, #tpu.memory_space<vmem>>, vector<2x32xf32>
      tpu.vector_store %arg7[%c0_17, %c0_18], %20 {strides = array<i32>} : memref<2x32xf32, #tpu.memory_space<vmem>>, vector<2x32xf32>,
      %cst_19 = arith.constant 0.000000e+00 : f32
      %22 = vector.broadcast %cst_19 : f32 to vector<2x1xf32>
      %c0_20 = arith.constant 0 : index
      %c0_21 = arith.constant 0 : index
      %23 = vector.load %arg8[%c0_20, %c0_21] : memref<2x1xf32, #tpu.memory_space<vmem>>, vector<2x1xf32>
      tpu.vector_store %arg8[%c0_20, %c0_21], %22 {strides = array<i32>} : memref<2x1xf32, #tpu.memory_space<vmem>>, vector<2x1xf32>,
    } else {
    }
    %c0 = arith.constant 0 : index
    %c0_1 = arith.constant 0 : index
    %c0_2 = arith.constant 0 : index
    %3 = vector.load %arg2[%c0, %c0_1, %c0_2] : memref<2x8x32xf32, #tpu.memory_space<vmem>>, vector<2x8x32xf32>
    %c0_3 = arith.constant 0 : index
    %c0_4 = arith.constant 0 : index
    %4 = vector.load %arg3[%c0_3, %c0_4] : memref<2x8xf32, #tpu.memory_space<vmem>>, vector<2x8xf32>
    %c0_5 = arith.constant 0 : index
    %c0_6 = arith.constant 0 : index
    %5 = vector.load %arg7[%c0_5, %c0_6] : memref<2x32xf32, #tpu.memory_space<vmem>>, vector<2x32xf32>
    %6 = vector.shape_cast %4 : vector<2x8xf32> to vector<2x8x1xf32>
    %7 = vector.broadcast %6 : vector<2x8x1xf32> to vector<2x8x32xf32>
    %8 = arith.mulf %3, %7 : vector<2x8x32xf32>
    %cst = arith.constant dense<0.000000e+00> : vector<2x32xf32>
    %9 = vector.multi_reduction <add>, %8, %cst [1] : vector<2x8x32xf32> to vector<2x32xf32>
    %10 = arith.addf %5, %9 : vector<2x32xf32>
    %c0_7 = arith.constant 0 : index
    %c0_8 = arith.constant 0 : index
    %11 = vector.load %arg7[%c0_7, %c0_8] : memref<2x32xf32, #tpu.memory_space<vmem>>, vector<2x32xf32>
    tpu.vector_store %arg7[%c0_7, %c0_8], %10 {strides = array<i32>} : memref<2x32xf32, #tpu.memory_space<vmem>>, vector<2x32xf32>,
    %c0_9 = arith.constant 0 : index
    %c0_10 = arith.constant 0 : index
    %12 = vector.load %arg8[%c0_9, %c0_10] : memref<2x1xf32, #tpu.memory_space<vmem>>, vector<2x1xf32>
    %cst_11 = arith.constant dense<0.000000e+00> : vector<2xf32>
    %13 = vector.multi_reduction <add>, %4, %cst_11 [1] : vector<2x8xf32> to vector<2xf32>
    %14 = vector.shape_cast %13 : vector<2xf32> to vector<2x1xf32>
    %15 = arith.addf %12, %14 : vector<2x1xf32>
    %c0_12 = arith.constant 0 : index
    %c0_13 = arith.constant 0 : index
    %16 = vector.load %arg8[%c0_12, %c0_13] : memref<2x1xf32, #tpu.memory_space<vmem>>, vector<2x1xf32>
    tpu.vector_store %arg8[%c0_12, %c0_13], %15 {strides = array<i32>} : memref<2x1xf32, #tpu.memory_space<vmem>>, vector<2x1xf32>,
    %c0_i32_14 = arith.constant 0 : i32
    %17 = arith.cmpi eq, %arg1, %c0_i32_14 : i32
    %18 = arith.extui %17 : i1 to i32
    %c0_i32_15 = arith.constant 0 : i32
    %19 = arith.cmpi ne, %18, %c0_i32_15 : i32
    scf.if %19 {
      %c0_16 = arith.constant 0 : index
      %c0_17 = arith.constant 0 : index
      %20 = vector.load %arg8[%c0_16, %c0_17] : memref<2x1xf32, #tpu.memory_space<vmem>>, vector<2x1xf32>
      %cst_18 = arith.constant 9.99999971E-10 : f32
      %21 = vector.broadcast %cst_18 : f32 to vector<2x1xf32>
      %22 = arith.maximumf %20, %21 : vector<2x1xf32>
      %c0_19 = arith.constant 0 : index
      %c0_20 = arith.constant 0 : index
      %23 = vector.load %arg7[%c0_19, %c0_20] : memref<2x32xf32, #tpu.memory_space<vmem>>, vector<2x32xf32>
      %c0_21 = arith.constant 0 : index
      %c0_22 = arith.constant 0 : index
      %24 = vector.load %arg4[%c0_21, %c0_22] : memref<32x128xf32, #tpu.memory_space<vmem>>, vector<32x128xf32>
      %cst_23 = arith.constant dense<0.000000e+00> : vector<2x128xf32>
      %25 = tpu.matmul %23, %24, %cst_23 {dimension_numbers = #tpu.dot_dimension_numbers<[1], [0], [0], [1], [0, 0, 1, 1], [], []>} : vector<2x32xf32>, vector<32x128xf32>, vector<2x128xf32> -> vector<2x128xf32>
      %26 = vector.broadcast %22 : vector<2x1xf32> to vector<2x128xf32>
      %27 = arith.divf %25, %26 : vector<2x128xf32>
      %c0_24 = arith.constant 0 : index
      %c0_25 = arith.constant 0 : index
      %28 = vector.load %arg5[%c0_24, %c0_25] : memref<1x128xf32, #tpu.memory_space<vmem>>, vector<1x128xf32>
      %29 = vector.broadcast %28 : vector<1x128xf32> to vector<2x128xf32>
      %30 = arith.addf %27, %29 : vector<2x128xf32>
      %c0_26 = arith.constant 0 : index
      %c0_27 = arith.constant 0 : index
      %31 = vector.load %arg6[%c0_26, %c0_27] : memref<2x128xf32, #tpu.memory_space<vmem>>, vector<2x128xf32>
      tpu.vector_store %arg6[%c0_26, %c0_27], %30 {strides = array<i32>} : memref<2x128xf32, #tpu.memory_space<vmem>>, vector<2x128xf32>,
    } else {
    }
    return
  }
  func.func @transform_0(%arg0: i32, %arg1: i32) -> (i32, i32, i32) {
    %c0_i32 = arith.constant 0 : i32
    %c0_i32_0 = arith.constant 0 : i32
    return %arg0, %arg1, %c0_i32 : i32, i32, i32
  }
  func.func @transform_1(%arg0: i32, %arg1: i32) -> (i32, i32) {
    %c0_i32 = arith.constant 0 : i32
    return %arg0, %arg1 : i32, i32
  }
  func.func @transform_2(%arg0: i32, %arg1: i32) -> (i32, i32) {
    %c0_i32 = arith.constant 0 : i32
    %c0_i32_0 = arith.constant 0 : i32
    %c0_i32_1 = arith.constant 0 : i32
    return %c0_i32, %c0_i32_0 : i32, i32
  }
  func.func @transform_3(%arg0: i32, %arg1: i32) -> (i32, i32) {
    %c0_i32 = arith.constant 0 : i32
    %c0_i32_0 = arith.constant 0 : i32
    %c0_i32_1 = arith.constant 0 : i32
    return %c0_i32, %c0_i32_0 : i32, i32
  }
  func.func @transform_4(%arg0: i32, %arg1: i32) -> (i32, i32) {
    %c0_i32 = arith.constant 0 : i32
    %c0_i32_0 = arith.constant 0 : i32
    return %arg0, %c0_i32 : i32, i32
  }
}

</mosaic_0001>

<llo_original>
// kernel: tpu_custom_call.1
$region0: #{tpu_custom_call.1}
  #allocation0 [shape = 'u32[]', space=smem, size = 0x4, offset = 0x4, fixed_abs, tag = 'smem constant byte address 0x4 - core index']
  #allocation1 [shape = 'u32[144,128]{1,0:T(1,128)}', space=vmem, size = 0x12000, scoped, tag = 'internal scratch']
  #allocation2 [shape = 'f32[2,32]{1,0:T(2,128)}', space=vmem, size = 0x400, scoped, tag = 'scratch operand']
  #allocation3 [shape = 'f32[2,1]{1,0:T(2,128)}', space=vmem, size = 0x400, scoped, tag = 'scratch operand']
  %s0 = inlined_call_operand.hbm [shape: f32[2,8,32], index: 0, kind: input, shape index: {}]
  %s1 = inlined_call_operand.vmem [shape: f32[2,8], index: 1, kind: input, shape index: {}]
  %s2 = inlined_call_operand.hbm [shape: f32[32,128], index: 2, kind: input, shape index: {}]
  %s3 = inlined_call_operand.vmem [shape: f32[1,128], index: 3, kind: input, shape index: {}]
  %s4 = inlined_call_operand.hbm [shape: f32[2,128], index: 4, kind: output, shape index: {}]
  %s5 = sld [smem:[#allocation0]]
  $region42: #{tpu_custom_call.1} parent=0
    _
  %s7 = ssub.s32 1, %s5
  %s8 = scalar_select 0, %s7, %s5
  $region1: #{tpu_custom_call.1} parent=0
    #allocation4 [shape = 'u8[8192]{0}', space=vmem, size = 0x2000, scoped, tag = 'input window, operand 0, single buffered']
    #allocation5 [shape = 's32[1]{0}', space=sflag, size = 0x4, scoped, tag = 'scoped memory for tpu_custom_call.1']
    #allocation6 [shape = 's32[1]{0}', space=sflag, size = 0x4, scoped, tag = 'scoped memory for tpu_custom_call.1']
    #allocation7 [shape = 'u8[16384]{0}', space=vmem, size = 0x4000, scoped, tag = 'input window, operand 2, single buffered']
    #allocation8 [shape = 's32[1]{0}', space=sflag, size = 0x4, scoped, tag = 'scoped memory for tpu_custom_call.1']
    #allocation9 [shape = 'u8[1024]{0}', space=vmem, size = 0x400, scoped, tag = 'output window, operand 0, single buffered']
    %9 = vsyncpa [#allocation5], 0
    %10 = vsyncpa [#allocation8], 0
    %11 = vsyncpa [#allocation6], 0
    // Predicated region
    $region2: #{tpu_custom_call.1} parent=1 // pred_check
      _
    $region3: #{tpu_custom_call.1} parent=1 // pred_check_branch
      %13 = sbr.rel (0) target = $region5
    $region4: #{tpu_custom_call.1} parent=1 // pred_region
      %s15 = ssub.s32 256, 256
      %16 = vsyncadd [#allocation5], %s15
      %s17 = sshll.u32 [#allocation4], 4
      %s18 = int_to_ptr.vmem [resolvable:$true] %s17
      %23 = dma.hbm_to_vmem [thread:$0]  %s0, 256, %s18, [#allocation5], 128, 128, 8
    $region5: #{tpu_custom_call.1} parent=1 // pred_fallthru
      _
    // Predicated region
    $region6: #{tpu_custom_call.1} parent=1 // pred_check
      _
    $region7: #{tpu_custom_call.1} parent=1 // pred_check_branch
      %25 = sbr.rel (0) target = $region9
    $region8: #{tpu_custom_call.1} parent=1 // pred_region
      _
    $region9: #{tpu_custom_call.1} parent=1 // pred_fallthru
      _
    // Predicated region
    $region10: #{tpu_custom_call.1} parent=1 // pred_check
      _
    $region11: #{tpu_custom_call.1} parent=1 // pred_check_branch
      %27 = sbr.rel (0) target = $region13
    $region12: #{tpu_custom_call.1} parent=1 // pred_region
      %s29 = ssub.s32 512, 512
      %30 = vsyncadd [#allocation8], %s29
      %s31 = sshll.u32 [#allocation7], 4
      %s32 = int_to_ptr.vmem [resolvable:$true] %s31
      %37 = dma.hbm_to_vmem [thread:$0]  %s2, 512, %s32, [#allocation8], 128, 128, 8
    $region13: #{tpu_custom_call.1} parent=1 // pred_fallthru
      _
    // Predicated region
    $region14: #{tpu_custom_call.1} parent=1 // pred_check
      _
    $region15: #{tpu_custom_call.1} parent=1 // pred_check_branch
      %39 = sbr.rel (0) target = $region17
    $region16: #{tpu_custom_call.1} parent=1 // pred_region
      _
    $region17: #{tpu_custom_call.1} parent=1 // pred_fallthru
      _
    // Predicated region
    $region18: #{tpu_custom_call.1} parent=1 // pred_check
      _
    $region19: #{tpu_custom_call.1} parent=1 // pred_check_branch
      %41 = sbr.rel (0) target = $region21
    $region20: #{tpu_custom_call.1} parent=1 // pred_region
      %42 = dma.done [#allocation5], 256
    $region21: #{tpu_custom_call.1} parent=1 // pred_fallthru
      _
    // Predicated region
    $region22: #{tpu_custom_call.1} parent=1 // pred_check
      _
    $region23: #{tpu_custom_call.1} parent=1 // pred_check_branch
      %44 = sbr.rel (0) target = $region25
    $region24: #{tpu_custom_call.1} parent=1 // pred_region
      %45 = dma.done [#allocation8], 512
    $region25: #{tpu_custom_call.1} parent=1 // pred_fallthru
      _
    %p46 = scmp.eq.s32.totalorder 0, 0
    // Predicated region
    $region26: #{tpu_custom_call.1} parent=1 // pred_check
      %p47 = pneg %p46
    $region27: #{tpu_custom_call.1} parent=1 // pred_check_branch
      %49 = sbr.rel (%p47) target = $region29
    $region28: #{tpu_custom_call.1} parent=1 // pred_region
      %vm50 = vcmask 254976
      %51 = vst.msk [vmem:[#allocation2] sm:$0x3] %vm50, 0.0
      %vm52 = vcmask 1024
      %53 = vst.msk [vmem:[#allocation3] sm:$0x3] %vm52, 0.0
    $region29: #{tpu_custom_call.1} parent=1 // pred_fallthru
      _
    %v54 = vld [vmem:[#allocation4] sm:$0xff]
    %v55 = vld [vmem:[#allocation4 + $0x8] sm:$0xff]
    %v56 = vld [vmem:[%s1] sm:$0x3]
    %v57 = vld [vmem:[#allocation2] sm:$0x3]
    %v58 = vlaneseq
    %v59 = vshrl.u32 %v58, 7
    %v60 = vsub.s32 0, %v59
    %v61 = vrot.slane %v56, %v60
    %63 = vbcast.lane.b32.xlu0 %v61, 256
    %v64 = vpop.permute.xlu0 %63
    %v65 = vlaneseq
    %v66 = vshrl.u32 %v65, 7
    %v67 = vsub.s32 1, %v66
    %v68 = vrot.slane %v56, %v67
    %70 = vbcast.lane.b32.xlu0 %v68, 256
    %v71 = vpop.permute.xlu0 %70
    %v72 = vmul.f32 %v54, %v64
    %v73 = vmul.f32 %v55, %v71
    %vm74 = vcmask 261120
    %v75 = vsel %vm74, %v72, 0.0
    %v76 = vrot.slane %v75, 4
    %v77 = vadd.f32 %v75, %v76
    %v78 = vrot.slane %v77, 2
    %v79 = vadd.f32 %v77, %v78
    %v80 = vrot.slane %v79, 1
    %v81 = vadd.f32 %v79, %v80
    %v82 = vsel %vm74, %v73, 0.0
    %v83 = vrot.slane %v82, 4
    %v84 = vadd.f32 %v82, %v83
    %v85 = vrot.slane %v84, 2
    %v86 = vadd.f32 %v84, %v85
    %v87 = vrot.slane %v86, 1
    %v88 = vadd.f32 %v86, %v87
    %vm91 = vcmask 1041409
    %v92 = vsel %vm91, %v88, %v81
    %v94 = vadd.f32 %v57, %v92
    %vm95 = vcmask 254976
    %96 = vst.msk [vmem:[#allocation2] sm:$0x3] %vm95, %v94
    %v97 = vld [vmem:[#allocation3] sm:$0x3]
    %vm98 = vcmask 58368
    %v99 = vsel %vm98, %v56, 0.0
    %100 = vadd.xlane.f32.xlu0 %v99
    %v101 = vpop.xlane.xlu0 %100
    %v102 = vadd.f32 %v97, %v101
    %vm103 = vcmask 1024
    %104 = vst.msk [vmem:[#allocation3] sm:$0x3] %vm103, %v102
    // Predicated region
    $region30: #{tpu_custom_call.1} parent=1 // pred_check
      %p105 = pneg %p46
    $region31: #{tpu_custom_call.1} parent=1 // pred_check_branch
      %107 = sbr.rel (%p105) target = $region33
    $region32: #{tpu_custom_call.1} parent=1 // pred_region
      %v108 = vld [vmem:[#allocation3] sm:$0x3]
      %v109 = vmax.f32 %v108, 1e-09
      %v110 = vld [vmem:[#allocation2] sm:$0x3]
      %v111 = vld [vmem:[#allocation7] sm:$0xff]
      %v112 = vld [vmem:[#allocation7 + $0x8] sm:$0xff]
      %v113 = vld [vmem:[#allocation7 + $0x10] sm:$0xff]
      %v114 = vld [vmem:[#allocation7 + $0x18] sm:$0xff]
      %v116 = vsel %vm74, %v110, 0
      %118 = vmatprep.subr.mxu0 0.0
      %119 = vmatpush1.msra.mxu0 %v111
      %120 = vmatprep.subr.mxu0 0.0
      %121 = vmatpush1.msra.mxu0 %v112
      %122 = vmatprep.subr.mxu0 0.0
      %123 = vmatpush1.msra.mxu0 %v113
      %124 = vmatprep.subr.mxu0 0.0
      %125 = vmatpush1.msra.mxu0 %v114
      %126 = vmatprep.subr.mxu0 0.0
      %127 = vmatpush1.msra.mxu0 0.0
      %128 = vmatprep.subr.mxu0 0.0
      %129 = vmatpush1.msra.mxu0 0.0
      %130 = vmatprep.subr.mxu0 0.0
      %131 = vmatpush1.msra.mxu0 0.0
      %132 = vmatprep.subr.mxu0 0.0
      %133 = vmatpush1.msra.mxu0 0.0
      %134 = vmatprep.subr.mxu0 0.0
      %135 = vmatpush1.msra.mxu0 0.0
      %136 = vmatprep.subr.mxu0 0.0
      %137 = vmatpush1.msra.mxu0 0.0
      %138 = vmatprep.subr.mxu0 0.0
      %139 = vmatpush1.msra.mxu0 0.0
      %140 = vmatprep.subr.mxu0 0.0
      %141 = vmatpush1.msra.mxu0 0.0
      %142 = vmatprep.subr.mxu0 0.0
      %143 = vmatpush1.msra.mxu0 0.0
      %144 = vmatprep.subr.mxu0 0.0
      %145 = vmatpush1.msra.mxu0 0.0
      %146 = vmatprep.subr.mxu0 0.0
      %147 = vmatpush1.msra.mxu0 0.0
      %148 = vmatprep.subr.mxu0 0.0
      %149 = vmatpush1.msra.mxu0 0.0
      %150 = vmatprep.subr.mxu0 0.0
      %151 = vmatpush1.msra.mxu0 0.0
      %152 = vmatprep.subr.mxu0 0.0
      %153 = vmatpush1.msra.mxu0 0.0
      %154 = vmatprep.subr.mxu0 0.0
      %155 = vmatpush1.msra.mxu0 0.0
      %156 = vmatprep.subr.mxu0 0.0
      %157 = vmatpush1.msra.mxu0 0.0
      %158 = vmatprep.subr.mxu0 0.0
      %159 = vmatpush1.msra.mxu0 0.0
      %160 = vmatprep.subr.mxu0 0.0
      %161 = vmatpush1.msra.mxu0 0.0
      %162 = vmatprep.subr.mxu0 0.0
      %163 = vmatpush1.msra.mxu0 0.0
      %164 = vmatprep.subr.mxu0 0.0
      %165 = vmatpush1.msra.mxu0 0.0
      %166 = vmatprep.subr.mxu0 0.0
      %167 = vmatpush1.msra.mxu0 0.0
      %168 = vmatprep.subr.mxu0 0.0
      %169 = vmatpush1.msra.mxu0 0.0
      %170 = vmatprep.subr.mxu0 0.0
      %171 = vmatpush1.msra.mxu0 0.0
      %172 = vmatprep.subr.mxu0 0.0
      %173 = vmatpush1.msra.mxu0 0.0
      %174 = vmatprep.subr.mxu0 0.0
      %175 = vmatpush1.msra.mxu0 0.0
      %176 = vmatprep.subr.mxu0 0.0
      %177 = vmatpush1.msra.mxu0 0.0
      %178 = vmatprep.subr.mxu0 0.0
      %179 = vmatpush1.msra.mxu0 0.0
      %180 = vmatprep.subr.mxu0 0.0
      %181 = vmatpush1.msra.mxu0 0.0
      %182 = vmatprep.mubr.f32.mxu0 0.0
      %183 = vmatmul.mubr.f32.gmra.mrb[0].mxu0 %v116
      %v184 = vpop.f32.mrb[0].mxu0
      %v185 = vadd.f32 0.0, %v184
      %v186 = vpop.f32.mrb[0].mxu0
      %187 = vdwg.mxu0
      %189 = vset.pattern.permute.xlu0 0
      %190 = vperm.xlu0 %189, %v109
      %v191 = vpop.permute.xlu0 %190
      %v193 = vrcp.pop %v191
      %v194 = vmul.f32 %v185, %v193
      %v195 = vld [vmem:[%s3] sm:$0x1]
      %v197 = vlaneseq
      %v198 = vshrl.u32 %v197, 7
      %v199 = vsub.s32 0, %v198
      %v200 = vrot.slane %v195, %v199
      %v202 = vadd.f32 %v194, %v200
      %203 = vst [vmem:[#allocation9] sm:$0x3] %v202
    $region33: #{tpu_custom_call.1} parent=1 // pred_fallthru
      _
    // Predicated region
    $region34: #{tpu_custom_call.1} parent=1 // pred_check
      _
    $region35: #{tpu_custom_call.1} parent=1 // pred_check_branch
      %205 = sbr.rel (0) target = $region37
    $region36: #{tpu_custom_call.1} parent=1 // pred_region
      %s207 = ssub.s32 32, 32
      %208 = vsyncadd [#allocation6], %s207
      %s210 = sshll.u32 [#allocation9], 4
      %s211 = int_to_ptr.vmem [resolvable:$true] %s210
      %213 = dma.vmem_to_hbm [thread:$0]  %s211, 32, %s4, [#allocation6]
    $region37: #{tpu_custom_call.1} parent=1 // pred_fallthru
      _
    // Predicated region
    $region38: #{tpu_custom_call.1} parent=1 // pred_check
      _
    $region39: #{tpu_custom_call.1} parent=1 // pred_check_branch
      %215 = sbr.rel (0) target = $region41
    $region40: #{tpu_custom_call.1} parent=1 // pred_region
      %216 = dma.done [#allocation6], 32
    $region41: #{tpu_custom_call.1} parent=1 // pred_fallthru
      _
    %217 = vsyncpa [#allocation5], 1
    %218 = vsyncpa [#allocation8], 1
    %219 = vsyncpa [#allocation6], 1

</llo_original>
